<compile_context>
chip_gen: v5e
topology: v5e:2x2
jax: 0.10.0
libtpu: 0.0.40
codegen_flags: <defaults>
</compile_context>

<pallas_src>
import jax
import jax.numpy as jnp
from jax.experimental import pallas as pl
from jax.experimental.pallas import tpu as pltpu


def mlp_g_kernel(x_ref,
                 w1_ref, b1_ref,
                 w2_ref, b2_ref,
                 w3_ref, b3_ref,
                 w4_ref, b4_ref,
                 out_ref):
    # bf16 MXU inputs, f32 accumulation via preferred_element_type.
    cdt = w1_ref.dtype

    # Layer 1: Linear(nz -> ngf) + ReLU   (x already bf16)
    h = jnp.dot(x_ref[...], w1_ref[...], preferred_element_type=jnp.float32)
    h = jnp.maximum(h + b1_ref[...], 0.0)
    # Layer 2: Linear(ngf -> ngf) + ReLU
    h = jnp.dot(h.astype(cdt), w2_ref[...], preferred_element_type=jnp.float32)
    h = jnp.maximum(h + b2_ref[...], 0.0)
    # Layer 3: Linear(ngf -> ngf) + ReLU
    h = jnp.dot(h.astype(cdt), w3_ref[...], preferred_element_type=jnp.float32)
    h = jnp.maximum(h + b3_ref[...], 0.0)
    # Layer 4: Linear(ngf -> nc*isize*isize), no activation
    y = jnp.dot(h.astype(cdt), w4_ref[...], preferred_element_type=jnp.float32)
    out_ref[...] = (y + b4_ref[...]).astype(out_ref.dtype)


def _physical_vmem_bytes(default=64 << 20):
    """Per-core VMEM capacity; conservative 64 MiB fallback (v7x) if unknown."""
    try:
        info = pltpu.get_tpu_info()
        return int(getattr(info, "vmem_capacity_bytes", default))
    except Exception:
        return default


def _round_up(x, m):
    return -(-x // m) * m


def mlp_g_forward(x, params, nc, isize, *, max_block_b=1024,
                  out_dtype=jnp.bfloat16):
    """x: (B, nz) or (B, nz, 1, 1). Returns (B, nc, isize, isize) in out_dtype."""
    B = x.shape[0]
    (w1, b1), (w2, b2), (w3, b3), (w4, b4) = params
    nz, ngf = w1.shape
    out_dim = nc * isize * isize
    assert w4.shape[1] == out_dim

    in_dt = w1.dtype                       # bf16 activations feed the MXU directly
    x2d = x.reshape(B, -1).astype(in_dt)   # input.view(B, nz) + single cast pass
    assert x2d.shape[1] == nz

    in_bytes = jnp.dtype(in_dt).itemsize
    out_bytes = jnp.dtype(out_dtype).itemsize
    param_bytes = sum(int(a.size) * a.dtype.itemsize for p in params for a in p)

    # --- VMEM-budgeted batch tile -----------------------------------------
    phys_vmem = _physical_vmem_bytes()
    budget = int(phys_vmem * 0.7)          # leave room for compiler scratch
    per_row = (2 * nz * in_bytes           # 2x pipelined input blocks
               + 2 * out_dim * out_bytes   # 2x pipelined output blocks
               + out_dim * 4               # f32 accumulator before output cast
               + ngf * 4 * 2)              # hidden activation temporaries
    bm_cap = max(8, (budget - param_bytes) // max(per_row, 1))
    bm_cap = max(8, min((int(bm_cap) // 8) * 8, max_block_b))

    if B <= 8:
        bm = B                             # single tiny block
    else:
        # >= 2 grid steps so v7x's two TensorCores both get work
        half = _round_up(-(-B // 2), 8)
        bm = max(8, min(bm_cap, half))
    grid = (pl.cdiv(B, bm),)               # ragged last block handled by Pallas

    # --- specs --------------------------------------------------------------
    resident = lambda i: (0, 0)            # same block every step -> VMEM-resident
    single = pl.Buffered(1)                # constant blocks: no double-buffering
    in_specs = [
        pl.BlockSpec((bm, nz), lambda i: (i, 0)),
        pl.BlockSpec(w1.shape, resident, pipeline_mode=single),
        pl.BlockSpec(b1.shape, resident, pipeline_mode=single),
        pl.BlockSpec(w2.shape, resident, pipeline_mode=single),
        pl.BlockSpec(b2.shape, resident, pipeline_mode=single),
        pl.BlockSpec(w3.shape, resident, pipeline_mode=single),
        pl.BlockSpec(b3.shape, resident, pipeline_mode=single),
        pl.BlockSpec(w4.shape, resident, pipeline_mode=single),
        pl.BlockSpec(b4.shape, resident, pipeline_mode=single),
    ]
    out_specs = pl.BlockSpec((bm, out_dim), lambda i: (i, 0))

    # Explicit scoped-VMEM limit: actual footprint * 1.5 + headroom, <= physical.
    vmem_needed = param_bytes + bm * per_row
    vmem_limit = int(min(phys_vmem, vmem_needed * 1.5 + (8 << 20)))

    # Advisory cost estimate so XLA can overlap this small custom call.
    flops = 2 * B * (nz * ngf + 2 * ngf * ngf + ngf * out_dim)
    bytes_accessed = int(x2d.size) * in_bytes + B * out_dim * out_bytes + param_bytes
    cost = pl.CostEstimate(flops=flops, transcendentals=0,
                           bytes_accessed=bytes_accessed)

    out2d = pl.pallas_call(
        mlp_g_kernel,
        grid=grid,
        out_shape=jax.ShapeDtypeStruct((B, out_dim), out_dtype),
        in_specs=in_specs,
        out_specs=out_specs,
        compiler_params=pltpu.CompilerParams(
            dimension_semantics=("parallel",),
            vmem_limit_bytes=vmem_limit),
        cost_estimate=cost,
    )(x2d, w1, b1, w2, b2, w3, b3, w4, b4)

    return out2d.reshape(B, nc, isize, isize)


def init_params(key, nz, ngf, nc, isize, weight_dtype=jnp.bfloat16):
    """Mimics torch.nn.Linear default init U(-1/sqrt(fan_in), 1/sqrt(fan_in)).
    Weights stored as (in_features, out_features) in bf16; biases (1, out) f32."""
    dims = [(nz, ngf), (ngf, ngf), (ngf, ngf), (ngf, nc * isize * isize)]
    params = []
    for fan_in, fan_out in dims:
        key, kw, kb = jax.random.split(key, 3)
        bound = 1.0 / (fan_in ** 0.5)
        w = jax.random.uniform(kw, (fan_in, fan_out), jnp.float32,
                               -bound, bound).astype(weight_dtype)
        b = jax.random.uniform(kb, (1, fan_out), jnp.float32, -bound, bound)
        params.append((w, b))
    return params


def _ref_forward(x, params, nc, isize):
    """Pure-JAX reference (f32 math; input rounded to bf16 like the kernel)."""
    B = x.shape[0]
    h = x.reshape(B, -1).astype(jnp.bfloat16).astype(jnp.float32)
    for i, (w, b) in enumerate(params):
        h = h @ w.astype(jnp.float32) + b
        if i < 3:
            h = jnp.maximum(h, 0.0)
    return h.reshape(B, nc, isize, isize)


if __name__ == "__main__":
    # Small, forward-consistent sizes (out_dim = nc*isize*isize = 1024, lane-friendly).
    nz, ngf, nc, isize, ngpu = 32, 64, 4, 16, 1

    key = jax.random.PRNGKey(0)
    key, kx = jax.random.split(key)
    params = init_params(key, nz, ngf, nc, isize)

    # --- small batch (single-block path), typical GAN latent shape (B, nz, 1, 1) ---
    B = 2
    x = jax.random.normal(kx, (B, nz, 1, 1), dtype=jnp.float32)
    out = mlp_g_forward(x, params, nc, isize)
    jax.block_until_ready(out)
    ref = _ref_forward(x, params, nc, isize)
    assert out.shape == (B, nc, isize, isize)
    assert jnp.allclose(out.astype(jnp.float32), ref, atol=5e-2, rtol=5e-2)

    # --- larger, non-divisible batch (exercises >=2 grid steps + ragged last block) ---
    key, kx2 = jax.random.split(key)
    B2 = 300
    x2 = jax.random.normal(kx2, (B2, nz, 1, 1), dtype=jnp.float32)
    out2 = mlp_g_forward(x2, params, nc, isize)
    jax.block_until_ready(out2)
    ref2 = _ref_forward(x2, params, nc, isize)
    assert out2.shape == (B2, nc, isize, isize)
    assert jnp.allclose(out2.astype(jnp.float32), ref2, atol=5e-2, rtol=5e-2)

    print("KERNEL_OK")
</pallas_src>

<mosaic_0001>
module attributes {stable_mosaic.version = 11 : i64} {
  func.func @mlp_g_kernel(%arg0: i32, %arg1: memref<2x32xbf16, #tpu.memory_space<vmem>>, %arg2: memref<32x64xbf16, #tpu.memory_space<vmem>>, %arg3: memref<1x64xf32, #tpu.memory_space<vmem>>, %arg4: memref<64x64xbf16, #tpu.memory_space<vmem>>, %arg5: memref<1x64xf32, #tpu.memory_space<vmem>>, %arg6: memref<64x64xbf16, #tpu.memory_space<vmem>>, %arg7: memref<1x64xf32, #tpu.memory_space<vmem>>, %arg8: memref<64x1024xbf16, #tpu.memory_space<vmem>>, %arg9: memref<1x1024xf32, #tpu.memory_space<vmem>>, %arg10: memref<2x1024xbf16, #tpu.memory_space<vmem>>) attributes {dimension_semantics = [#tpu.dimension_semantics<parallel>], iteration_bounds = array<i64: 1>, scalar_prefetch = 0 : i64, scratch_operands = 0 : i64, tpu.core_type = #tpu.core_type<tc>, window_params = [{transform_indices = @transform_0, window_bounds = array<i64: 2, 32>}, {pipeline_mode = #tpu.pipeline_mode<synchronous>, transform_indices = @transform_1, window_bounds = array<i64: 32, 64>}, {pipeline_mode = #tpu.pipeline_mode<synchronous>, transform_indices = @transform_2, window_bounds = array<i64: 1, 64>}, {pipeline_mode = #tpu.pipeline_mode<synchronous>, transform_indices = @transform_3, window_bounds = array<i64: 64, 64>}, {pipeline_mode = #tpu.pipeline_mode<synchronous>, transform_indices = @transform_4, window_bounds = array<i64: 1, 64>}, {pipeline_mode = #tpu.pipeline_mode<synchronous>, transform_indices = @transform_5, window_bounds = array<i64: 64, 64>}, {pipeline_mode = #tpu.pipeline_mode<synchronous>, transform_indices = @transform_6, window_bounds = array<i64: 1, 64>}, {pipeline_mode = #tpu.pipeline_mode<synchronous>, transform_indices = @transform_7, window_bounds = array<i64: 64, 1024>}, {pipeline_mode = #tpu.pipeline_mode<synchronous>, transform_indices = @transform_8, window_bounds = array<i64: 1, 1024>}, {transform_indices = @transform_9, window_bounds = array<i64: 2, 1024>}]} {
    %c0 = arith.constant 0 : index
    %c0_0 = arith.constant 0 : index
    %0 = vector.load %arg1[%c0, %c0_0] : memref<2x32xbf16, #tpu.memory_space<vmem>>, vector<2x32xbf16>
    %c0_1 = arith.constant 0 : index
    %c0_2 = arith.constant 0 : index
    %1 = vector.load %arg2[%c0_1, %c0_2] : memref<32x64xbf16, #tpu.memory_space<vmem>>, vector<32x64xbf16>
    %cst = arith.constant dense<0.000000e+00> : vector<2x64xf32>
    %2 = tpu.matmul %0, %1, %cst {dimension_numbers = #tpu.dot_dimension_numbers<[1], [0], [0], [1], [0, 0, 1, 1], [], []>} : vector<2x32xbf16>, vector<32x64xbf16>, vector<2x64xf32> -> vector<2x64xf32>
    %c0_3 = arith.constant 0 : index
    %c0_4 = arith.constant 0 : index
    %3 = vector.load %arg3[%c0_3, %c0_4] : memref<1x64xf32, #tpu.memory_space<vmem>>, vector<1x64xf32>
    %4 = vector.broadcast %3 : vector<1x64xf32> to vector<2x64xf32>
    %5 = arith.addf %2, %4 : vector<2x64xf32>
    %cst_5 = arith.constant 0.000000e+00 : f32
    %6 = vector.broadcast %cst_5 : f32 to vector<2x64xf32>
    %7 = arith.maximumf %5, %6 : vector<2x64xf32>
    %8 = arith.truncf %7 : vector<2x64xf32> to vector<2x64xbf16>
    %c0_6 = arith.constant 0 : index
    %c0_7 = arith.constant 0 : index
    %9 = vector.load %arg4[%c0_6, %c0_7] : memref<64x64xbf16, #tpu.memory_space<vmem>>, vector<64x64xbf16>
    %cst_8 = arith.constant dense<0.000000e+00> : vector<2x64xf32>
    %10 = tpu.matmul %8, %9, %cst_8 {dimension_numbers = #tpu.dot_dimension_numbers<[1], [0], [0], [1], [0, 0, 1, 1], [], []>} : vector<2x64xbf16>, vector<64x64xbf16>, vector<2x64xf32> -> vector<2x64xf32>
    %c0_9 = arith.constant 0 : index
    %c0_10 = arith.constant 0 : index
    %11 = vector.load %arg5[%c0_9, %c0_10] : memref<1x64xf32, #tpu.memory_space<vmem>>, vector<1x64xf32>
    %12 = vector.broadcast %11 : vector<1x64xf32> to vector<2x64xf32>
    %13 = arith.addf %10, %12 : vector<2x64xf32>
    %cst_11 = arith.constant 0.000000e+00 : f32
    %14 = vector.broadcast %cst_11 : f32 to vector<2x64xf32>
    %15 = arith.maximumf %13, %14 : vector<2x64xf32>
    %16 = arith.truncf %15 : vector<2x64xf32> to vector<2x64xbf16>
    %c0_12 = arith.constant 0 : index
    %c0_13 = arith.constant 0 : index
    %17 = vector.load %arg6[%c0_12, %c0_13] : memref<64x64xbf16, #tpu.memory_space<vmem>>, vector<64x64xbf16>
    %cst_14 = arith.constant dense<0.000000e+00> : vector<2x64xf32>
    %18 = tpu.matmul %16, %17, %cst_14 {dimension_numbers = #tpu.dot_dimension_numbers<[1], [0], [0], [1], [0, 0, 1, 1], [], []>} : vector<2x64xbf16>, vector<64x64xbf16>, vector<2x64xf32> -> vector<2x64xf32>
    %c0_15 = arith.constant 0 : index
    %c0_16 = arith.constant 0 : index
    %19 = vector.load %arg7[%c0_15, %c0_16] : memref<1x64xf32, #tpu.memory_space<vmem>>, vector<1x64xf32>
    %20 = vector.broadcast %19 : vector<1x64xf32> to vector<2x64xf32>
    %21 = arith.addf %18, %20 : vector<2x64xf32>
    %cst_17 = arith.constant 0.000000e+00 : f32
    %22 = vector.broadcast %cst_17 : f32 to vector<2x64xf32>
    %23 = arith.maximumf %21, %22 : vector<2x64xf32>
    %24 = arith.truncf %23 : vector<2x64xf32> to vector<2x64xbf16>
    %c0_18 = arith.constant 0 : index
    %c0_19 = arith.constant 0 : index
    %25 = vector.load %arg8[%c0_18, %c0_19] : memref<64x1024xbf16, #tpu.memory_space<vmem>>, vector<64x1024xbf16>
    %cst_20 = arith.constant dense<0.000000e+00> : vector<2x1024xf32>
    %26 = tpu.matmul %24, %25, %cst_20 {dimension_numbers = #tpu.dot_dimension_numbers<[1], [0], [0], [1], [0, 0, 1, 1], [], []>} : vector<2x64xbf16>, vector<64x1024xbf16>, vector<2x1024xf32> -> vector<2x1024xf32>
    %c0_21 = arith.constant 0 : index
    %c0_22 = arith.constant 0 : index
    %27 = vector.load %arg9[%c0_21, %c0_22] : memref<1x1024xf32, #tpu.memory_space<vmem>>, vector<1x1024xf32>
    %28 = vector.broadcast %27 : vector<1x1024xf32> to vector<2x1024xf32>
    %29 = arith.addf %26, %28 : vector<2x1024xf32>
    %30 = arith.truncf %29 : vector<2x1024xf32> to vector<2x1024xbf16>
    %c0_23 = arith.constant 0 : index
    %c0_24 = arith.constant 0 : index
    %31 = vector.load %arg10[%c0_23, %c0_24] : memref<2x1024xbf16, #tpu.memory_space<vmem>>, vector<2x1024xbf16>
    tpu.vector_store %arg10[%c0_23, %c0_24], %30 {strides = array<i32>} : memref<2x1024xbf16, #tpu.memory_space<vmem>>, vector<2x1024xbf16>,
    return
  }
  func.func @transform_0(%arg0: i32) -> (i32, i32) {
    %c0_i32 = arith.constant 0 : i32
    %c0_i32_0 = arith.constant 0 : i32
    return %arg0, %c0_i32 : i32, i32
  }
  func.func @transform_1(%arg0: i32) -> (i32, i32) {
    %c0_i32 = arith.constant 0 : i32
    %c0_i32_0 = arith.constant 0 : i32
    %c0_i32_1 = arith.constant 0 : i32
    return %c0_i32, %c0_i32_0 : i32, i32
  }
  func.func @transform_2(%arg0: i32) -> (i32, i32) {
    %c0_i32 = arith.constant 0 : i32
    %c0_i32_0 = arith.constant 0 : i32
    %c0_i32_1 = arith.constant 0 : i32
    return %c0_i32, %c0_i32_0 : i32, i32
  }
  func.func @transform_3(%arg0: i32) -> (i32, i32) {
    %c0_i32 = arith.constant 0 : i32
    %c0_i32_0 = arith.constant 0 : i32
    %c0_i32_1 = arith.constant 0 : i32
    return %c0_i32, %c0_i32_0 : i32, i32
  }
  func.func @transform_4(%arg0: i32) -> (i32, i32) {
    %c0_i32 = arith.constant 0 : i32
    %c0_i32_0 = arith.constant 0 : i32
    %c0_i32_1 = arith.constant 0 : i32
    return %c0_i32, %c0_i32_0 : i32, i32
  }
  func.func @transform_5(%arg0: i32) -> (i32, i32) {
    %c0_i32 = arith.constant 0 : i32
    %c0_i32_0 = arith.constant 0 : i32
    %c0_i32_1 = arith.constant 0 : i32
    return %c0_i32, %c0_i32_0 : i32, i32
  }
  func.func @transform_6(%arg0: i32) -> (i32, i32) {
    %c0_i32 = arith.constant 0 : i32
    %c0_i32_0 = arith.constant 0 : i32
    %c0_i32_1 = arith.constant 0 : i32
    return %c0_i32, %c0_i32_0 : i32, i32
  }
  func.func @transform_7(%arg0: i32) -> (i32, i32) {
    %c0_i32 = arith.constant 0 : i32
    %c0_i32_0 = arith.constant 0 : i32
    %c0_i32_1 = arith.constant 0 : i32
    return %c0_i32, %c0_i32_0 : i32, i32
  }
  func.func @transform_8(%arg0: i32) -> (i32, i32) {
    %c0_i32 = arith.constant 0 : i32
    %c0_i32_0 = arith.constant 0 : i32
    %c0_i32_1 = arith.constant 0 : i32
    return %c0_i32, %c0_i32_0 : i32, i32
  }
  func.func @transform_9(%arg0: i32) -> (i32, i32) {
    %c0_i32 = arith.constant 0 : i32
    %c0_i32_0 = arith.constant 0 : i32
    return %arg0, %c0_i32 : i32, i32
  }
}

</mosaic_0001>

<llo_original>
// kernel: tpu_custom_call.1
$region0: #{tpu_custom_call.1}
  #allocation0 [shape = 'u32[]', space=smem, size = 0x4, offset = 0x4, fixed_abs, tag = 'smem constant byte address 0x4 - core index']
  #allocation1 [shape = 'u32[72,128]{1,0:T(1,128)}', space=vmem, size = 0x9000, scoped, tag = 'internal scratch']
  %s0 = inlined_call_operand.hbm [shape: bf16[2,32], index: 0, kind: input, shape index: {}]
  %s1 = inlined_call_operand.hbm [shape: bf16[32,64], index: 1, kind: input, shape index: {}]
  %s2 = inlined_call_operand.vmem [shape: f32[1,64], index: 2, kind: input, shape index: {}]
  %s3 = inlined_call_operand.hbm [shape: bf16[64,64], index: 3, kind: input, shape index: {}]
  %s4 = inlined_call_operand.vmem [shape: f32[1,64], index: 4, kind: input, shape index: {}]
  %s5 = inlined_call_operand.hbm [shape: bf16[64,64], index: 5, kind: input, shape index: {}]
  %s6 = inlined_call_operand.vmem [shape: f32[1,64], index: 6, kind: input, shape index: {}]
  %s7 = inlined_call_operand.hbm [shape: bf16[64,1024], index: 7, kind: input, shape index: {}]
  %s8 = inlined_call_operand.hbm [shape: f32[1,1024], index: 8, kind: input, shape index: {}]
  %s9 = inlined_call_operand.hbm [shape: bf16[2,1024], index: 9, kind: output, shape index: {}]
  %s10 = sld [smem:[#allocation0]]
  $region70: #{tpu_custom_call.1} parent=0
    _
  %s12 = ssub.s32 1, %s10
  %s13 = scalar_select 0, %s12, %s10
  $region1: #{tpu_custom_call.1} parent=0
    #allocation2 [shape = 'u8[512]{0}', space=vmem, size = 0x400, scoped, tag = 'input window, operand 0, single buffered']
    #allocation3 [shape = 's32[1]{0}', space=sflag, size = 0x4, scoped, tag = 'scoped memory for tpu_custom_call.1']
    #allocation4 [shape = 's32[1]{0}', space=sflag, size = 0x4, scoped, tag = 'scoped memory for tpu_custom_call.1']
    #allocation5 [shape = 'u8[8192]{0}', space=vmem, size = 0x2000, scoped, tag = 'input window, operand 1, single buffered']
    #allocation6 [shape = 's32[1]{0}', space=sflag, size = 0x4, scoped, tag = 'scoped memory for tpu_custom_call.1']
    #allocation7 [shape = 'u8[16384]{0}', space=vmem, size = 0x4000, scoped, tag = 'input window, operand 3, single buffered']
    #allocation8 [shape = 'u8[16384]{0}', space=vmem, size = 0x4000, scoped, tag = 'input window, operand 5, single buffered']
    #allocation9 [shape = 's32[1]{0}', space=sflag, size = 0x4, scoped, tag = 'scoped memory for tpu_custom_call.1']
    #allocation10 [shape = 'u8[131072]{0}', space=vmem, size = 0x20000, scoped, tag = 'input window, operand 7, single buffered']
    #allocation11 [shape = 'u8[4096]{0}', space=vmem, size = 0x1000, scoped, tag = 'input window, operand 8, single buffered']
    #allocation12 [shape = 's32[1]{0}', space=sflag, size = 0x4, scoped, tag = 'scoped memory for tpu_custom_call.1']
    #allocation13 [shape = 'u8[4096]{0}', space=vmem, size = 0x1000, scoped, tag = 'output window, operand 0, single buffered']
    %14 = vsyncpa [#allocation3], 0
    %15 = vsyncpa [#allocation6], 0
    %16 = vsyncpa [#allocation9], 0
    %17 = vsyncpa [#allocation12], 0
    %18 = vsyncpa [#allocation4], 0
    // Predicated region
    $region2: #{tpu_custom_call.1} parent=1 // pred_check
      _
    $region3: #{tpu_custom_call.1} parent=1 // pred_check_branch
      %20 = sbr.rel (0) target = $region5
    $region4: #{tpu_custom_call.1} parent=1 // pred_region
      %22 = vsyncadd [#allocation3], 0
      %s24 = sshll.u32 %s0, 4
      %s25 = int_to_ptr.hbm [resolvable:$true] %s24
      %s26 = sshll.u32 [#allocation2], 4
      %s27 = int_to_ptr.vmem [resolvable:$true] %s26
      %29 = dma.hbm_to_vmem [thread:$0]  %s25, 16, %s27, [#allocation3]
    $region5: #{tpu_custom_call.1} parent=1 // pred_fallthru
      _
    // Predicated region
    $region6: #{tpu_custom_call.1} parent=1 // pred_check
      _
    $region7: #{tpu_custom_call.1} parent=1 // pred_check_branch
      %31 = sbr.rel (0) target = $region9
    $region8: #{tpu_custom_call.1} parent=1 // pred_region
      %33 = vsyncadd [#allocation6], 0
      %s34 = sshll.u32 %s1, 4
      %s35 = int_to_ptr.hbm [resolvable:$true] %s34
      %s36 = sshll.u32 [#allocation5], 4
      %s37 = int_to_ptr.vmem [resolvable:$true] %s36
      %42 = dma.hbm_to_vmem [thread:$0]  %s35, 256, %s37, [#allocation6], 64, 64, 4
    $region9: #{tpu_custom_call.1} parent=1 // pred_fallthru
      _
    // Predicated region
    $region10: #{tpu_custom_call.1} parent=1 // pred_check
      _
    $region11: #{tpu_custom_call.1} parent=1 // pred_check_branch
      %44 = sbr.rel (0) target = $region13
    $region12: #{tpu_custom_call.1} parent=1 // pred_region
      _
    $region13: #{tpu_custom_call.1} parent=1 // pred_fallthru
      _
    // Predicated region
    $region14: #{tpu_custom_call.1} parent=1 // pred_check
      _
    $region15: #{tpu_custom_call.1} parent=1 // pred_check_branch
      %46 = sbr.rel (0) target = $region17
    $region16: #{tpu_custom_call.1} parent=1 // pred_region
      %48 = vsyncadd [#allocation6], 0
      %s49 = sshll.u32 %s3, 4
      %s50 = int_to_ptr.hbm [resolvable:$true] %s49
      %s51 = sshll.u32 [#allocation7], 4
      %s52 = int_to_ptr.vmem [resolvable:$true] %s51
      %57 = dma.hbm_to_vmem [thread:$0]  %s50, 512, %s52, [#allocation6], 64, 64, 4
    $region17: #{tpu_custom_call.1} parent=1 // pred_fallthru
      _
    // Predicated region
    $region18: #{tpu_custom_call.1} parent=1 // pred_check
      _
    $region19: #{tpu_custom_call.1} parent=1 // pred_check_branch
      %59 = sbr.rel (0) target = $region21
    $region20: #{tpu_custom_call.1} parent=1 // pred_region
      _
    $region21: #{tpu_custom_call.1} parent=1 // pred_fallthru
      _
    // Predicated region
    $region22: #{tpu_custom_call.1} parent=1 // pred_check
      _
    $region23: #{tpu_custom_call.1} parent=1 // pred_check_branch
      %61 = sbr.rel (0) target = $region25
    $region24: #{tpu_custom_call.1} parent=1 // pred_region
      %63 = vsyncadd [#allocation9], 0
      %s64 = sshll.u32 %s5, 4
      %s65 = int_to_ptr.hbm [resolvable:$true] %s64
      %s66 = sshll.u32 [#allocation8], 4
      %s67 = int_to_ptr.vmem [resolvable:$true] %s66
      %72 = dma.hbm_to_vmem [thread:$0]  %s65, 512, %s67, [#allocation9], 64, 64, 4
    $region25: #{tpu_custom_call.1} parent=1 // pred_fallthru
      _
    // Predicated region
    $region26: #{tpu_custom_call.1} parent=1 // pred_check
      _
    $region27: #{tpu_custom_call.1} parent=1 // pred_check_branch
      %74 = sbr.rel (0) target = $region29
    $region28: #{tpu_custom_call.1} parent=1 // pred_region
      _
    $region29: #{tpu_custom_call.1} parent=1 // pred_fallthru
      _
    // Predicated region
    $region30: #{tpu_custom_call.1} parent=1 // pred_check
      _
    $region31: #{tpu_custom_call.1} parent=1 // pred_check_branch
      %76 = sbr.rel (0) target = $region33
    $region32: #{tpu_custom_call.1} parent=1 // pred_region
      %78 = vsyncadd [#allocation9], 0
      %s79 = sshll.u32 %s7, 4
      %s80 = int_to_ptr.hbm [resolvable:$true] %s79
      %s81 = sshll.u32 [#allocation10], 4
      %s82 = int_to_ptr.vmem [resolvable:$true] %s81
      %87 = dma.hbm_to_vmem [thread:$0]  %s80, 4096, %s82, [#allocation9], 512, 512, 32
    $region33: #{tpu_custom_call.1} parent=1 // pred_fallthru
      _
    // Predicated region
    $region34: #{tpu_custom_call.1} parent=1 // pred_check
      _
    $region35: #{tpu_custom_call.1} parent=1 // pred_check_branch
      %89 = sbr.rel (0) target = $region37
    $region36: #{tpu_custom_call.1} parent=1 // pred_region
      %91 = vsyncadd [#allocation12], 0
      %s93 = sshll.u32 %s8, 4
      %s94 = int_to_ptr.hbm [resolvable:$true] %s93
      %s95 = sshll.u32 [#allocation11], 4
      %s96 = int_to_ptr.vmem [resolvable:$true] %s95
      %98 = dma.hbm_to_vmem [thread:$0]  %s94, 128, %s96, [#allocation12]
    $region37: #{tpu_custom_call.1} parent=1 // pred_fallthru
      _
    // Predicated region
    $region38: #{tpu_custom_call.1} parent=1 // pred_check
      _
    $region39: #{tpu_custom_call.1} parent=1 // pred_check_branch
      %100 = sbr.rel (0) target = $region41
    $region40: #{tpu_custom_call.1} parent=1 // pred_region
      %102 = dma.done [#allocation3], 16
    $region41: #{tpu_custom_call.1} parent=1 // pred_fallthru
      _
    // Predicated region
    $region42: #{tpu_custom_call.1} parent=1 // pred_check
      _
    $region43: #{tpu_custom_call.1} parent=1 // pred_check_branch
      %104 = sbr.rel (0) target = $region45
    $region44: #{tpu_custom_call.1} parent=1 // pred_region
      %106 = dma.done [#allocation6], 256
    $region45: #{tpu_custom_call.1} parent=1 // pred_fallthru
      _
    // Predicated region
    $region46: #{tpu_custom_call.1} parent=1 // pred_check
      _
    $region47: #{tpu_custom_call.1} parent=1 // pred_check_branch
      %108 = sbr.rel (0) target = $region49
    $region48: #{tpu_custom_call.1} parent=1 // pred_region
      %110 = dma.done [#allocation6], 512
    $region49: #{tpu_custom_call.1} parent=1 // pred_fallthru
      _
    // Predicated region
    $region50: #{tpu_custom_call.1} parent=1 // pred_check
      _
    $region51: #{tpu_custom_call.1} parent=1 // pred_check_branch
      %112 = sbr.rel (0) target = $region53
    $region52: #{tpu_custom_call.1} parent=1 // pred_region
      %114 = dma.done [#allocation9], 512
    $region53: #{tpu_custom_call.1} parent=1 // pred_fallthru
      _
    // Predicated region
    $region54: #{tpu_custom_call.1} parent=1 // pred_check
      _
    $region55: #{tpu_custom_call.1} parent=1 // pred_check_branch
      %116 = sbr.rel (0) target = $region57
    $region56: #{tpu_custom_call.1} parent=1 // pred_region
      %118 = dma.done [#allocation9], 4096
    $region57: #{tpu_custom_call.1} parent=1 // pred_fallthru
      _
    // Predicated region
    $region58: #{tpu_custom_call.1} parent=1 // pred_check
      _
    $region59: #{tpu_custom_call.1} parent=1 // pred_check_branch
      %120 = sbr.rel (0) target = $region61
    $region60: #{tpu_custom_call.1} parent=1 // pred_region
      %122 = dma.done [#allocation12], 128
    $region61: #{tpu_custom_call.1} parent=1 // pred_fallthru
      _
    %v124 = vld [vmem:[#allocation2] sm:$0x1]
    %v125 = vld [vmem:[#allocation5] sm:$0xf]
    %v126 = vld [vmem:[#allocation5 + $0x4] sm:$0xf]
    %v127 = vld [vmem:[#allocation5 + $0x8] sm:$0xf]
    %v128 = vld [vmem:[#allocation5 + $0xc] sm:$0xf]
    %v129 = vld [vmem:[%s2] sm:$0x1]
    %v131 = vperm.slane %v129, 0
    %v137 = vunpack.c.l.b16 %v125
    %v138 = vunpack.c.l.b16 %v126
    %v139 = vunpack.c.l.b16 %v127
    %v140 = vunpack.c.l.b16 %v128
    %v141 = vpack.c.b16 %v138, %v137
    %v142 = vpack.c.b16 %v140, %v139
    %vm145 = vcmask 261120
    %v147 = vsel %vm145, %v124, 0
    %149 = vmatpush.bf16.msra.mxu0 0
    %150 = vmatpush.bf16.msra.mxu0 0
    %151 = vmatpush.bf16.msra.mxu0 0
    %152 = vmatpush.bf16.msra.mxu0 0
    %153 = vmatpush.bf16.msra.mxu0 0
    %154 = vmatpush.bf16.msra.mxu0 0
    %155 = vmatpush.bf16.msra.mxu0 %v142
    %156 = vmatpush.bf16.msra.mxu0 %v141
    %157 = vmatmul.bf16.gmra.mxu0 %v147
    %v158 = vpop.f32.mrf.mxu0
    %v159 = vadd.f32 %v131, %v158
    %v160 = vpop.f32.mrf.mxu0
    %161 = vdwg.mxu0
    %v162 = vmax.f32 %v159, 0.0
    %v163 = vpack.c.bf16 %v162, %v162
    %v164 = vld [vmem:[#allocation7] sm:$0xf]
    %v165 = vld [vmem:[#allocation7 + $0x4] sm:$0xf]
    %v166 = vld [vmem:[#allocation7 + $0x8] sm:$0xf]
    %v167 = vld [vmem:[#allocation7 + $0xc] sm:$0xf]
    %v168 = vld [vmem:[#allocation7 + $0x10] sm:$0xf]
    %v169 = vld [vmem:[#allocation7 + $0x14] sm:$0xf]
    %v170 = vld [vmem:[#allocation7 + $0x18] sm:$0xf]
    %v171 = vld [vmem:[#allocation7 + $0x1c] sm:$0xf]
    %v172 = vld [vmem:[%s4] sm:$0x1]
    %v174 = vperm.slane %v172, 0
    %v184 = vunpack.c.l.b16 %v164
    %v185 = vunpack.c.l.b16 %v165
    %v186 = vunpack.c.l.b16 %v166
    %v187 = vunpack.c.l.b16 %v167
    %v188 = vunpack.c.l.b16 %v168
    %v189 = vunpack.c.l.b16 %v169
    %v190 = vunpack.c.l.b16 %v170
    %v191 = vunpack.c.l.b16 %v171
    %v192 = vpack.c.b16 %v185, %v184
    %v193 = vpack.c.b16 %v187, %v186
    %v194 = vpack.c.b16 %v189, %v188
    %v195 = vpack.c.b16 %v191, %v190
    %vm200 = vcmask 523264
    %v202 = vsel %vm200, %v163, 0
    %204 = vmatpush.bf16.msra.mxu0 0
    %205 = vmatpush.bf16.msra.mxu0 0
    %206 = vmatpush.bf16.msra.mxu0 0
    %207 = vmatpush.bf16.msra.mxu0 0
    %208 = vmatpush.bf16.msra.mxu0 %v195
    %209 = vmatpush.bf16.msra.mxu0 %v194
    %210 = vmatpush.bf16.msra.mxu0 %v193
    %211 = vmatpush.bf16.msra.mxu0 %v192
    %212 = vmatmul.bf16.gmra.mxu0 %v202
    %v213 = vpop.f32.mrf.mxu0
    %v214 = vadd.f32 %v174, %v213
    %v215 = vpop.f32.mrf.mxu0
    %216 = vdwg.mxu0
    %v217 = vmax.f32 %v214, 0.0
    %v218 = vpack.c.bf16 %v217, %v217
    %v219 = vld [vmem:[#allocation8] sm:$0xf]
    %v220 = vld [vmem:[#allocation8 + $0x4] sm:$0xf]
    %v221 = vld [vmem:[#allocation8 + $0x8] sm:$0xf]
    %v222 = vld [vmem:[#allocation8 + $0xc] sm:$0xf]
    %v223 = vld [vmem:[#allocation8 + $0x10] sm:$0xf]
    %v224 = vld [vmem:[#allocation8 + $0x14] sm:$0xf]
    %v225 = vld [vmem:[#allocation8 + $0x18] sm:$0xf]
    %v226 = vld [vmem:[#allocation8 + $0x1c] sm:$0xf]
    %v227 = vld [vmem:[%s6] sm:$0x1]
    %v229 = vperm.slane %v227, 0
    %v239 = vunpack.c.l.b16 %v219
    %v240 = vunpack.c.l.b16 %v220
    %v241 = vunpack.c.l.b16 %v221
    %v242 = vunpack.c.l.b16 %v222
    %v243 = vunpack.c.l.b16 %v223
    %v244 = vunpack.c.l.b16 %v224
    %v245 = vunpack.c.l.b16 %v225
    %v246 = vunpack.c.l.b16 %v226
    %v247 = vpack.c.b16 %v240, %v239
    %v248 = vpack.c.b16 %v242, %v241
    %v249 = vpack.c.b16 %v244, %v243
    %v250 = vpack.c.b16 %v246, %v245
    %v256 = vsel %vm200, %v218, 0
    %258 = vmatpush.bf16.msra.mxu0 0
    %259 = vmatpush.bf16.msra.mxu0 0
    %260 = vmatpush.bf16.msra.mxu0 0
    %261 = vmatpush.bf16.msra.mxu0 0
    %262 = vmatpush.bf16.msra.mxu0 %v250
    %263 = vmatpush.bf16.msra.mxu0 %v249
    %264 = vmatpush.bf16.msra.mxu0 %v248
    %265 = vmatpush.bf16.msra.mxu0 %v247
    %266 = vmatmul.bf16.gmra.mxu0 %v256
    %v267 = vpop.f32.mrf.mxu0
    %v268 = vadd.f32 %v229, %v267
    %v269 = vpop.f32.mrf.mxu0
    %270 = vdwg.mxu0
    %v271 = vmax.f32 %v268, 0.0
    %v272 = vpack.c.bf16 %v271, %v271
    %v273 = vld [vmem:[#allocation10] sm:$0xff]
    %v274 = vld [vmem:[#allocation10 + $0x8] sm:$0xff]
    %v275 = vld [vmem:[#allocation10 + $0x10] sm:$0xff]
    %v276 = vld [vmem:[#allocation10 + $0x18] sm:$0xff]
    %v277 = vld [vmem:[#allocation10 + $0x20] sm:$0xff]
    %v278 = vld [vmem:[#allocation10 + $0x28] sm:$0xff]
    %v279 = vld [vmem:[#allocation10 + $0x30] sm:$0xff]
    %v280 = vld [vmem:[#allocation10 + $0x38] sm:$0xff]
    %v281 = vld [vmem:[#allocation10 + $0x40] sm:$0xff]
    %v282 = vld [vmem:[#allocation10 + $0x48] sm:$0xff]
    %v283 = vld [vmem:[#allocation10 + $0x50] sm:$0xff]
    %v284 = vld [vmem:[#allocation10 + $0x58] sm:$0xff]
    %v285 = vld [vmem:[#allocation10 + $0x60] sm:$0xff]
    %v286 = vld [vmem:[#allocation10 + $0x68] sm:$0xff]
    %v287 = vld [vmem:[#allocation10 + $0x70] sm:$0xff]
    %v288 = vld [vmem:[#allocation10 + $0x78] sm:$0xff]
    %v289 = vld [vmem:[#allocation10 + $0x80] sm:$0xff]
    %v290 = vld [vmem:[#allocation10 + $0x88] sm:$0xff]
    %v291 = vld [vmem:[#allocation10 + $0x90] sm:$0xff]
    %v292 = vld [vmem:[#allocation10 + $0x98] sm:$0xff]
    %v293 = vld [vmem:[#allocation10 + $0xa0] sm:$0xff]
    %v294 = vld [vmem:[#allocation10 + $0xa8] sm:$0xff]
    %v295 = vld [vmem:[#allocation10 + $0xb0] sm:$0xff]
    %v296 = vld [vmem:[#allocation10 + $0xb8] sm:$0xff]
    %v297 = vld [vmem:[#allocation10 + $0xc0] sm:$0xff]
    %v298 = vld [vmem:[#allocation10 + $0xc8] sm:$0xff]
    %v299 = vld [vmem:[#allocation10 + $0xd0] sm:$0xff]
    %v300 = vld [vmem:[#allocation10 + $0xd8] sm:$0xff]
    %v301 = vld [vmem:[#allocation10 + $0xe0] sm:$0xff]
    %v302 = vld [vmem:[#allocation10 + $0xe8] sm:$0xff]
    %v303 = vld [vmem:[#allocation10 + $0xf0] sm:$0xff]
    %v304 = vld [vmem:[#allocation10 + $0xf8] sm:$0xff]
    %v305 = vld [vmem:[#allocation11] sm:$0xff]
    %v307 = vperm.slane %v305, 0
    %v308 = vperm.slane %v305, 1
    %v309 = vperm.slane %v305, 2
    %v310 = vperm.slane %v305, 3
    %v311 = vperm.slane %v305, 4
    %v312 = vperm.slane %v305, 5
    %v313 = vperm.slane %v305, 6
    %v314 = vperm.slane %v305, 7
    %v355 = vunpack.c.l.b16 %v273
    %v356 = vunpack.c.h.b16 %v273
    %v357 = vunpack.c.l.b16 %v274
    %v358 = vunpack.c.h.b16 %v274
    %v359 = vunpack.c.l.b16 %v275
    %v360 = vunpack.c.h.b16 %v275
    %v361 = vunpack.c.l.b16 %v276
    %v362 = vunpack.c.h.b16 %v276
    %v363 = vunpack.c.l.b16 %v277
    %v364 = vunpack.c.h.b16 %v277
    %v365 = vunpack.c.l.b16 %v278
    %v366 = vunpack.c.h.b16 %v278
    %v367 = vunpack.c.l.b16 %v279
    %v368 = vunpack.c.h.b16 %v279
    %v369 = vunpack.c.l.b16 %v280
    %v370 = vunpack.c.h.b16 %v280
    %v371 = vunpack.c.l.b16 %v281
    %v372 = vunpack.c.h.b16 %v281
    %v373 = vunpack.c.l.b16 %v282
    %v374 = vunpack.c.h.b16 %v282
    %v375 = vunpack.c.l.b16 %v283
    %v376 = vunpack.c.h.b16 %v283
    %v377 = vunpack.c.l.b16 %v284
    %v378 = vunpack.c.h.b16 %v284
    %v379 = vunpack.c.l.b16 %v285
    %v380 = vunpack.c.h.b16 %v285
    %v381 = vunpack.c.l.b16 %v286
    %v382 = vunpack.c.h.b16 %v286
    %v383 = vunpack.c.l.b16 %v287
    %v384 = vunpack.c.h.b16 %v287
    %v385 = vunpack.c.l.b16 %v288
    %v386 = vunpack.c.h.b16 %v288
    %v387 = vunpack.c.l.b16 %v289
    %v388 = vunpack.c.h.b16 %v289
    %v389 = vunpack.c.l.b16 %v290
    %v390 = vunpack.c.h.b16 %v290
    %v391 = vunpack.c.l.b16 %v291
    %v392 = vunpack.c.h.b16 %v291
    %v393 = vunpack.c.l.b16 %v292
    %v394 = vunpack.c.h.b16 %v292
    %v395 = vunpack.c.l.b16 %v293
    %v396 = vunpack.c.h.b16 %v293
    %v397 = vunpack.c.l.b16 %v294
    %v398 = vunpack.c.h.b16 %v294
    %v399 = vunpack.c.l.b16 %v295
    %v400 = vunpack.c.h.b16 %v295
    %v401 = vunpack.c.l.b16 %v296
    %v402 = vunpack.c.h.b16 %v296
    %v403 = vunpack.c.l.b16 %v297
    %v404 = vunpack.c.h.b16 %v297
    %v405 = vunpack.c.l.b16 %v298
    %v406 = vunpack.c.h.b16 %v298
    %v407 = vunpack.c.l.b16 %v299
    %v408 = vunpack.c.h.b16 %v299
    %v409 = vunpack.c.l.b16 %v300
    %v410 = vunpack.c.h.b16 %v300
    %v411 = vunpack.c.l.b16 %v301
    %v412 = vunpack.c.h.b16 %v301
    %v413 = vunpack.c.l.b16 %v302
    %v414 = vunpack.c.h.b16 %v302
    %v415 = vunpack.c.l.b16 %v303
    %v416 = vunpack.c.h.b16 %v303
    %v417 = vunpack.c.l.b16 %v304
    %v418 = vunpack.c.h.b16 %v304
    %v419 = vpack.c.b16 %v363, %v355
    %v420 = vpack.c.b16 %v364, %v356
    %v421 = vpack.c.b16 %v365, %v357
    %v422 = vpack.c.b16 %v366, %v358
    %v423 = vpack.c.b16 %v367, %v359
    %v424 = vpack.c.b16 %v368, %v360
    %v425 = vpack.c.b16 %v369, %v361
    %v426 = vpack.c.b16 %v370, %v362
    %v427 = vpack.c.b16 %v379, %v371
    %v428 = vpack.c.b16 %v380, %v372
    %v429 = vpack.c.b16 %v381, %v373
    %v430 = vpack.c.b16 %v382, %v374
    %v431 = vpack.c.b16 %v383, %v375
    %v432 = vpack.c.b16 %v384, %v376
    %v433 = vpack.c.b16 %v385, %v377
    %v434 = vpack.c.b16 %v386, %v378
    %v435 = vpack.c.b16 %v395, %v387
    %v436 = vpack.c.b16 %v396, %v388
    %v437 = vpack.c.b16 %v397, %v389
    %v438 = vpack.c.b16 %v398, %v390
    %v439 = vpack.c.b16 %v399, %v391
    %v440 = vpack.c.b16 %v400, %v392
    %v441 = vpack.c.b16 %v401, %v393
    %v442 = vpack.c.b16 %v402, %v394
    %v443 = vpack.c.b16 %v411, %v403
    %v444 = vpack.c.b16 %v412, %v404
    %v445 = vpack.c.b16 %v413, %v405
    %v446 = vpack.c.b16 %v414, %v406
    %v447 = vpack.c.b16 %v415, %v407
    %v448 = vpack.c.b16 %v416, %v408
    %v449 = vpack.c.b16 %v417, %v409
    %v450 = vpack.c.b16 %v418, %v410
    %v484 = vsel %vm200, %v272, 0
    %486 = vmatpush.bf16.msra.mxu0 0
    %487 = vmatpush.bf16.msra.mxu0 0
    %488 = vmatpush.bf16.msra.mxu0 0
    %489 = vmatpush.bf16.msra.mxu0 0
    %490 = vmatpush.bf16.msra.mxu0 %v443
    %491 = vmatpush.bf16.msra.mxu0 %v435
    %492 = vmatpush.bf16.msra.mxu0 %v427
    %493 = vmatpush.bf16.msra.mxu0 %v419
    %494 = vmatmul.bf16.gmra.mxu0 %v484
    %v495 = vpop.f32.mrf.mxu0
    %v496 = vadd.f32 %v307, %v495
    %v497 = vpop.f32.mrf.mxu0
    %498 = vdwg.mxu0
    %499 = vmatpush.bf16.msra.mxu0 0
    %500 = vmatpush.bf16.msra.mxu0 0
    %501 = vmatpush.bf16.msra.mxu0 0
    %502 = vmatpush.bf16.msra.mxu0 0
    %503 = vmatpush.bf16.msra.mxu0 %v444
    %504 = vmatpush.bf16.msra.mxu0 %v436
    %505 = vmatpush.bf16.msra.mxu0 %v428
    %506 = vmatpush.bf16.msra.mxu0 %v420
    %507 = vmatmul.bf16.gmra.mxu0 %v484
    %v508 = vpop.f32.mrf.mxu0
    %v509 = vadd.f32 %v308, %v508
    %v510 = vpop.f32.mrf.mxu0
    %511 = vdwg.mxu0
    %512 = vmatpush.bf16.msra.mxu0 0
    %513 = vmatpush.bf16.msra.mxu0 0
    %514 = vmatpush.bf16.msra.mxu0 0
    %515 = vmatpush.bf16.msra.mxu0 0
    %516 = vmatpush.bf16.msra.mxu0 %v445
    %517 = vmatpush.bf16.msra.mxu0 %v437
    %518 = vmatpush.bf16.msra.mxu0 %v429
    %519 = vmatpush.bf16.msra.mxu0 %v421
    %520 = vmatmul.bf16.gmra.mxu0 %v484
    %v521 = vpop.f32.mrf.mxu0
    %v522 = vadd.f32 %v309, %v521
    %v523 = vpop.f32.mrf.mxu0
    %524 = vdwg.mxu0
    %525 = vmatpush.bf16.msra.mxu0 0
    %526 = vmatpush.bf16.msra.mxu0 0
    %527 = vmatpush.bf16.msra.mxu0 0
    %528 = vmatpush.bf16.msra.mxu0 0
    %529 = vmatpush.bf16.msra.mxu0 %v446
    %530 = vmatpush.bf16.msra.mxu0 %v438
    %531 = vmatpush.bf16.msra.mxu0 %v430
    %532 = vmatpush.bf16.msra.mxu0 %v422
    %533 = vmatmul.bf16.gmra.mxu0 %v484
    %v534 = vpop.f32.mrf.mxu0
    %v535 = vadd.f32 %v310, %v534
    %v536 = vpop.f32.mrf.mxu0
    %537 = vdwg.mxu0
    %538 = vmatpush.bf16.msra.mxu0 0
    %539 = vmatpush.bf16.msra.mxu0 0
    %540 = vmatpush.bf16.msra.mxu0 0
    %541 = vmatpush.bf16.msra.mxu0 0
    %542 = vmatpush.bf16.msra.mxu0 %v447
    %543 = vmatpush.bf16.msra.mxu0 %v439
    %544 = vmatpush.bf16.msra.mxu0 %v431
    %545 = vmatpush.bf16.msra.mxu0 %v423
    %546 = vmatmul.bf16.gmra.mxu0 %v484
    %v547 = vpop.f32.mrf.mxu0
    %v548 = vadd.f32 %v311, %v547
    %v549 = vpop.f32.mrf.mxu0
    %550 = vdwg.mxu0
    %551 = vmatpush.bf16.msra.mxu0 0
    %552 = vmatpush.bf16.msra.mxu0 0
    %553 = vmatpush.bf16.msra.mxu0 0
    %554 = vmatpush.bf16.msra.mxu0 0
    %555 = vmatpush.bf16.msra.mxu0 %v448
    %556 = vmatpush.bf16.msra.mxu0 %v440
    %557 = vmatpush.bf16.msra.mxu0 %v432
    %558 = vmatpush.bf16.msra.mxu0 %v424
    %559 = vmatmul.bf16.gmra.mxu0 %v484
    %v560 = vpop.f32.mrf.mxu0
    %v561 = vadd.f32 %v312, %v560
    %v562 = vpop.f32.mrf.mxu0
    %563 = vdwg.mxu0
    %564 = vmatpush.bf16.msra.mxu0 0
    %565 = vmatpush.bf16.msra.mxu0 0
    %566 = vmatpush.bf16.msra.mxu0 0
    %567 = vmatpush.bf16.msra.mxu0 0
    %568 = vmatpush.bf16.msra.mxu0 %v449
    %569 = vmatpush.bf16.msra.mxu0 %v441
    %570 = vmatpush.bf16.msra.mxu0 %v433
    %571 = vmatpush.bf16.msra.mxu0 %v425
    %572 = vmatmul.bf16.gmra.mxu0 %v484
    %v573 = vpop.f32.mrf.mxu0
    %v574 = vadd.f32 %v313, %v573
    %v575 = vpop.f32.mrf.mxu0
    %576 = vdwg.mxu0
    %577 = vmatpush.bf16.msra.mxu0 0
    %578 = vmatpush.bf16.msra.mxu0 0
    %579 = vmatpush.bf16.msra.mxu0 0
    %580 = vmatpush.bf16.msra.mxu0 0
    %581 = vmatpush.bf16.msra.mxu0 %v450
    %582 = vmatpush.bf16.msra.mxu0 %v442
    %583 = vmatpush.bf16.msra.mxu0 %v434
    %584 = vmatpush.bf16.msra.mxu0 %v426
    %585 = vmatmul.bf16.gmra.mxu0 %v484
    %v586 = vpop.f32.mrf.mxu0
    %v587 = vadd.f32 %v314, %v586
    %v588 = vpop.f32.mrf.mxu0
    %589 = vdwg.mxu0
    %v590 = vpack.c.bf16 %v509, %v496
    %v591 = vpack.c.bf16 %v535, %v522
    %v592 = vpack.c.bf16 %v561, %v548
    %v593 = vpack.c.bf16 %v587, %v574
    %v598 = vrot.slane %v590, 3
    %v599 = vrot.slane %v591, 6
    %v600 = vrot.slane %v591, 1
    %v601 = vrot.slane %v592, 4
    %v602 = vrot.slane %v592, 7
    %v603 = vrot.slane %v593, 2
    %v604 = vrot.slane %v593, 5
    %vm605 = vcmask 1040384
    %v608 = vsel %vm605, %v590, %v598
    %vm609 = vcmask 1042434
    %v612 = vsel %vm609, %v599, %v600
    %vm613 = vcmask 1041408
    %v614 = vsel %vm613, %v608, %v612
    %vm615 = vcmask 1044484
    %v618 = vsel %vm615, %v601, %v602
    %vm619 = vcmask 1046534
    %v622 = vsel %vm619, %v603, %v604
    %vm623 = vcmask 1045508
    %v624 = vsel %vm623, %v618, %v622
    %vm625 = vcmask 1043456
    %v626 = vsel %vm625, %v614, %v624
    %628 = vst [vmem:[#allocation13] sm:$0xff] %v626
    // Predicated region
    $region62: #{tpu_custom_call.1} parent=1 // pred_check
      _
    $region63: #{tpu_custom_call.1} parent=1 // pred_check_branch
      %630 = sbr.rel (0) target = $region65
    $region64: #{tpu_custom_call.1} parent=1 // pred_region
      %632 = vsyncadd [#allocation4], 0
      %s634 = sshll.u32 [#allocation13], 4
      %s635 = int_to_ptr.vmem [resolvable:$true] %s634
      %s636 = sshll.u32 %s9, 4
      %s637 = int_to_ptr.hbm [resolvable:$true] %s636
      %639 = dma.vmem_to_hbm [thread:$0]  %s635, 128, %s637, [#allocation4]
    $region65: #{tpu_custom_call.1} parent=1 // pred_fallthru
      _
    // Predicated region
    $region66: #{tpu_custom_call.1} parent=1 // pred_check
      _
    $region67: #{tpu_custom_call.1} parent=1 // pred_check_branch
      %641 = sbr.rel (0) target = $region69
    $region68: #{tpu_custom_call.1} parent=1 // pred_region
      %643 = dma.done [#allocation4], 128
    $region69: #{tpu_custom_call.1} parent=1 // pred_fallthru
      _
    %644 = vsyncpa [#allocation3], 1
    %645 = vsyncpa [#allocation6], 1
    %646 = vsyncpa [#allocation9], 1
    %647 = vsyncpa [#allocation12], 1
    %648 = vsyncpa [#allocation4], 1

</llo_original>
